<compile_context>
chip_gen: v5e
topology: v5e:2x2
jax: 0.10.0
libtpu: 0.0.40
codegen_flags: <defaults>
</compile_context>

<pallas_src>
import jax
import jax.numpy as jnp
from jax.experimental import pallas as pl
from jax.experimental.pallas import tpu as pltpu


def bert_output_kernel(x_ref, w_ref, b_ref, res_ref, gamma_ref, beta_ref, o_ref):
    # dense: [TM, 4H](bf16) @ [4H, H](bf16) -> [TM, H], f32 accumulation on the MXU.
    h = jnp.dot(x_ref[...], w_ref[...], preferred_element_type=jnp.float32)
    # + bias, + residual (all f32)
    h = h + b_ref[...] + res_ref[...].astype(jnp.float32)
    # TODO(synk): dropout(p=0.1) is identity in eval mode; training-mode RNG mask not implemented.
    # LayerNorm over last dim, eps = 1e-12, elementwise affine (f32 numerics).
    mean = jnp.mean(h, axis=-1, keepdims=True)
    cent = h - mean
    var = jnp.mean(cent * cent, axis=-1, keepdims=True)
    norm = cent * jax.lax.rsqrt(var + 1e-12)
    o_ref[...] = (norm * gamma_ref[...] + beta_ref[...]).astype(o_ref.dtype)


def bert_output(hidden_states, input_tensor, weight, bias, gamma, beta, *, tm=256):
    """hidden_states: [B, S, 4H], input_tensor: [B, S, H] -> [B, S, H]."""
    B, S, H4 = hidden_states.shape
    H = input_tensor.shape[-1]
    assert H4 == 4 * H
    M = B * S

    # Shrink the token tile for small inputs (keep it a multiple of the 8-row sublane),
    # then pad the token count up to a multiple of the tile (handles ragged B*S).
    tm = min(tm, max(8, pl.cdiv(M, 8) * 8))
    Mp = pl.cdiv(M, tm) * tm

    # bf16 matmul operands (halves HBM traffic + resident weight, peaks the MXU).
    x2d = hidden_states.reshape(M, H4).astype(jnp.bfloat16)
    r2d = input_tensor.reshape(M, H).astype(jnp.float32)
    if Mp != M:
        x2d = jnp.pad(x2d, ((0, Mp - M), (0, 0)))
        r2d = jnp.pad(r2d, ((0, Mp - M), (0, 0)))
    w_bf16 = weight.astype(jnp.bfloat16)
    b2d = bias.reshape(1, H).astype(jnp.float32)
    g2d = gamma.reshape(1, H).astype(jnp.float32)
    be2d = beta.reshape(1, H).astype(jnp.float32)

    out_dtype = hidden_states.dtype
    flops = 2 * Mp * H4 * H
    bytes_accessed = int(
        x2d.size * 2                                   # bf16 activations
        + w_bf16.size * 2                              # bf16 weight
        + r2d.size * 4                                 # f32 residual
        + Mp * H * jnp.dtype(out_dtype).itemsize       # output
        + 3 * H * 4                                    # bias/gamma/beta
    )

    resident = lambda i: (0, 0)  # grid-invariant operands

    out = pl.pallas_call(
        bert_output_kernel,
        out_shape=jax.ShapeDtypeStruct((Mp, H), out_dtype),
        grid_spec=pltpu.PrefetchScalarGridSpec(
            num_scalar_prefetch=0,
            grid=(Mp // tm,),
            in_specs=[
                pl.BlockSpec((tm, H4), lambda i: (i, 0)),                      # x tile (bf16)
                pl.BlockSpec((H4, H), resident,
                             pipeline_mode=pl.Buffered(buffer_count=1)),       # weight (resident)
                pl.BlockSpec((1, H), resident,
                             pipeline_mode=pl.Buffered(buffer_count=1)),       # bias
                pl.BlockSpec((tm, H), lambda i: (i, 0)),                       # residual tile
                pl.BlockSpec((1, H), resident,
                             pipeline_mode=pl.Buffered(buffer_count=1)),       # gamma
                pl.BlockSpec((1, H), resident,
                             pipeline_mode=pl.Buffered(buffer_count=1)),       # beta
            ],
            out_specs=pl.BlockSpec((tm, H), lambda i: (i, 0)),
        ),
        compiler_params=pltpu.CompilerParams(
            dimension_semantics=("parallel",),     # megacore-shardable token loop
            vmem_limit_bytes=64 << 20,             # explicit budget (fits v5e/v6e/v7x)
        ),
        cost_estimate=pl.CostEstimate(
            flops=flops, transcendentals=0, bytes_accessed=bytes_accessed),
    )(x2d, w_bf16, b2d, r2d, g2d, be2d)

    if Mp != M:
        out = out[:M]
    return out.reshape(B, S, H)


def reference(hidden_states, input_tensor, weight, bias, gamma, beta):
    h = jnp.einsum("bsk,kh->bsh",
                   hidden_states.astype(jnp.float32),
                   weight.astype(jnp.float32)) + bias
    h = h + input_tensor.astype(jnp.float32)
    mean = jnp.mean(h, axis=-1, keepdims=True)
    var = jnp.mean((h - mean) ** 2, axis=-1, keepdims=True)
    return ((h - mean) * jax.lax.rsqrt(var + 1e-12)) * gamma + beta


if __name__ == "__main__":
    B, S, H = 2, 8, 32
    key = jax.random.PRNGKey(0)
    k1, k2, k3, k4, k5 = jax.random.split(key, 5)

    hidden_states = jax.random.normal(k1, (B, S, 4 * H), dtype=jnp.float32)
    input_tensor = jax.random.normal(k2, (B, S, H), dtype=jnp.float32)

    # Deterministic parameter init (nn.Linear-like uniform, LayerNorm affine = ones/zeros)
    bound = 1.0 / (4 * H) ** 0.5
    weight = jax.random.uniform(k3, (4 * H, H), minval=-bound, maxval=bound, dtype=jnp.float32)
    bias = jax.random.uniform(k4, (H,), minval=-bound, maxval=bound, dtype=jnp.float32)
    gamma = jnp.ones((H,), dtype=jnp.float32)
    beta = jnp.zeros((H,), dtype=jnp.float32)

    out = bert_output(hidden_states, input_tensor, weight, bias, gamma, beta)
    jax.block_until_ready(out)

    ref = reference(hidden_states, input_tensor, weight, bias, gamma, beta)
    assert out.shape == (B, S, H)
    # bf16 matmul inputs with f32 accumulation -> compare with bf16-level tolerance.
    assert jnp.allclose(out, ref, atol=2e-2, rtol=2e-2)
    print("KERNEL_OK")
</pallas_src>

<mosaic_0001>
module attributes {stable_mosaic.version = 11 : i64} {
  func.func @bert_output_kernel(%arg0: i32, %arg1: memref<16x128xbf16, #tpu.memory_space<vmem>>, %arg2: memref<128x32xbf16, #tpu.memory_space<vmem>>, %arg3: memref<1x32xf32, #tpu.memory_space<vmem>>, %arg4: memref<16x32xf32, #tpu.memory_space<vmem>>, %arg5: memref<1x32xf32, #tpu.memory_space<vmem>>, %arg6: memref<1x32xf32, #tpu.memory_space<vmem>>, %arg7: memref<16x32xf32, #tpu.memory_space<vmem>>) attributes {dimension_semantics = [#tpu.dimension_semantics<parallel>], iteration_bounds = array<i64: 1>, scalar_prefetch = 0 : i64, scratch_operands = 0 : i64, tpu.core_type = #tpu.core_type<tc>, window_params = [{transform_indices = @transform_0, window_bounds = array<i64: 16, 128>}, {pipeline_mode = #tpu.pipeline_mode<synchronous>, transform_indices = @transform_1, window_bounds = array<i64: 128, 32>}, {pipeline_mode = #tpu.pipeline_mode<synchronous>, transform_indices = @transform_2, window_bounds = array<i64: 1, 32>}, {transform_indices = @transform_3, window_bounds = array<i64: 16, 32>}, {pipeline_mode = #tpu.pipeline_mode<synchronous>, transform_indices = @transform_4, window_bounds = array<i64: 1, 32>}, {pipeline_mode = #tpu.pipeline_mode<synchronous>, transform_indices = @transform_5, window_bounds = array<i64: 1, 32>}, {transform_indices = @transform_6, window_bounds = array<i64: 16, 32>}]} {
    %c0 = arith.constant 0 : index
    %c0_0 = arith.constant 0 : index
    %0 = vector.load %arg1[%c0, %c0_0] : memref<16x128xbf16, #tpu.memory_space<vmem>>, vector<16x128xbf16>
    %c0_1 = arith.constant 0 : index
    %c0_2 = arith.constant 0 : index
    %1 = vector.load %arg2[%c0_1, %c0_2] : memref<128x32xbf16, #tpu.memory_space<vmem>>, vector<128x32xbf16>
    %cst = arith.constant dense<0.000000e+00> : vector<16x32xf32>
    %2 = tpu.matmul %0, %1, %cst {dimension_numbers = #tpu.dot_dimension_numbers<[1], [0], [0], [1], [0, 0, 1, 1], [], []>} : vector<16x128xbf16>, vector<128x32xbf16>, vector<16x32xf32> -> vector<16x32xf32>
    %c0_3 = arith.constant 0 : index
    %c0_4 = arith.constant 0 : index
    %3 = vector.load %arg3[%c0_3, %c0_4] : memref<1x32xf32, #tpu.memory_space<vmem>>, vector<1x32xf32>
    %4 = vector.broadcast %3 : vector<1x32xf32> to vector<16x32xf32>
    %5 = arith.addf %2, %4 : vector<16x32xf32>
    %c0_5 = arith.constant 0 : index
    %c0_6 = arith.constant 0 : index
    %6 = vector.load %arg4[%c0_5, %c0_6] : memref<16x32xf32, #tpu.memory_space<vmem>>, vector<16x32xf32>
    %7 = arith.addf %5, %6 : vector<16x32xf32>
    %cst_7 = arith.constant dense<0.000000e+00> : vector<16xf32>
    %8 = vector.multi_reduction <add>, %7, %cst_7 [1] : vector<16x32xf32> to vector<16xf32>
    %9 = vector.shape_cast %8 : vector<16xf32> to vector<16x1xf32>
    %cst_8 = arith.constant 3.200000e+01 : f32
    %10 = vector.broadcast %cst_8 : f32 to vector<16x1xf32>
    %11 = arith.divf %9, %10 : vector<16x1xf32>
    %12 = vector.broadcast %11 : vector<16x1xf32> to vector<16x32xf32>
    %13 = arith.subf %7, %12 : vector<16x32xf32>
    %14 = arith.mulf %13, %13 : vector<16x32xf32>
    %cst_9 = arith.constant dense<0.000000e+00> : vector<16xf32>
    %15 = vector.multi_reduction <add>, %14, %cst_9 [1] : vector<16x32xf32> to vector<16xf32>
    %16 = vector.shape_cast %15 : vector<16xf32> to vector<16x1xf32>
    %cst_10 = arith.constant 3.200000e+01 : f32
    %17 = vector.broadcast %cst_10 : f32 to vector<16x1xf32>
    %18 = arith.divf %16, %17 : vector<16x1xf32>
    %cst_11 = arith.constant 9.99999996E-13 : f32
    %19 = vector.broadcast %cst_11 : f32 to vector<16x1xf32>
    %20 = arith.addf %18, %19 : vector<16x1xf32>
    %21 = math.rsqrt %20 : vector<16x1xf32>
    %22 = vector.broadcast %21 : vector<16x1xf32> to vector<16x32xf32>
    %23 = arith.mulf %13, %22 : vector<16x32xf32>
    %c0_12 = arith.constant 0 : index
    %c0_13 = arith.constant 0 : index
    %24 = vector.load %arg5[%c0_12, %c0_13] : memref<1x32xf32, #tpu.memory_space<vmem>>, vector<1x32xf32>
    %25 = vector.broadcast %24 : vector<1x32xf32> to vector<16x32xf32>
    %26 = arith.mulf %23, %25 : vector<16x32xf32>
    %c0_14 = arith.constant 0 : index
    %c0_15 = arith.constant 0 : index
    %27 = vector.load %arg6[%c0_14, %c0_15] : memref<1x32xf32, #tpu.memory_space<vmem>>, vector<1x32xf32>
    %28 = vector.broadcast %27 : vector<1x32xf32> to vector<16x32xf32>
    %29 = arith.addf %26, %28 : vector<16x32xf32>
    %c0_16 = arith.constant 0 : index
    %c0_17 = arith.constant 0 : index
    %30 = vector.load %arg7[%c0_16, %c0_17] : memref<16x32xf32, #tpu.memory_space<vmem>>, vector<16x32xf32>
    tpu.vector_store %arg7[%c0_16, %c0_17], %29 {strides = array<i32>} : memref<16x32xf32, #tpu.memory_space<vmem>>, vector<16x32xf32>,
    return
  }
  func.func @transform_0(%arg0: i32) -> (i32, i32) {
    %c0_i32 = arith.constant 0 : i32
    %c0_i32_0 = arith.constant 0 : i32
    return %arg0, %c0_i32 : i32, i32
  }
  func.func @transform_1(%arg0: i32) -> (i32, i32) {
    %c0_i32 = arith.constant 0 : i32
    %c0_i32_0 = arith.constant 0 : i32
    %c0_i32_1 = arith.constant 0 : i32
    return %c0_i32, %c0_i32_0 : i32, i32
  }
  func.func @transform_2(%arg0: i32) -> (i32, i32) {
    %c0_i32 = arith.constant 0 : i32
    %c0_i32_0 = arith.constant 0 : i32
    %c0_i32_1 = arith.constant 0 : i32
    return %c0_i32, %c0_i32_0 : i32, i32
  }
  func.func @transform_3(%arg0: i32) -> (i32, i32) {
    %c0_i32 = arith.constant 0 : i32
    %c0_i32_0 = arith.constant 0 : i32
    return %arg0, %c0_i32 : i32, i32
  }
  func.func @transform_4(%arg0: i32) -> (i32, i32) {
    %c0_i32 = arith.constant 0 : i32
    %c0_i32_0 = arith.constant 0 : i32
    %c0_i32_1 = arith.constant 0 : i32
    return %c0_i32, %c0_i32_0 : i32, i32
  }
  func.func @transform_5(%arg0: i32) -> (i32, i32) {
    %c0_i32 = arith.constant 0 : i32
    %c0_i32_0 = arith.constant 0 : i32
    %c0_i32_1 = arith.constant 0 : i32
    return %c0_i32, %c0_i32_0 : i32, i32
  }
  func.func @transform_6(%arg0: i32) -> (i32, i32) {
    %c0_i32 = arith.constant 0 : i32
    %c0_i32_0 = arith.constant 0 : i32
    return %arg0, %c0_i32 : i32, i32
  }
}

</mosaic_0001>

<llo_original>
// kernel: tpu_custom_call.1
$region0: #{tpu_custom_call.1}
  #allocation0 [shape = 'u32[]', space=smem, size = 0x4, offset = 0x4, fixed_abs, tag = 'smem constant byte address 0x4 - core index']
  #allocation1 [shape = 'u32[72,128]{1,0:T(1,128)}', space=vmem, size = 0x9000, scoped, tag = 'internal scratch']
  %s0 = inlined_call_operand.vmem [shape: bf16[16,128], index: 0, kind: input, shape index: {}]
  %s1 = inlined_call_operand.vmem [shape: bf16[128,32], index: 1, kind: input, shape index: {}]
  %s2 = inlined_call_operand.vmem [shape: f32[1,32], index: 2, kind: input, shape index: {}]
  %s3 = inlined_call_operand.vmem [shape: f32[16,32], index: 3, kind: input, shape index: {}]
  %s4 = inlined_call_operand.vmem [shape: f32[1,32], index: 4, kind: input, shape index: {}]
  %s5 = inlined_call_operand.vmem [shape: f32[1,32], index: 5, kind: input, shape index: {}]
  %s6 = inlined_call_operand.hbm [shape: f32[16,32], index: 6, kind: output, shape index: {}]
  %s7 = sld [smem:[#allocation0]]
  $region34: #{tpu_custom_call.1} parent=0
    _
  %s9 = ssub.s32 1, %s7
  %s10 = scalar_select 0, %s9, %s7
  $region1: #{tpu_custom_call.1} parent=0
    #allocation2 [shape = 'u8[8192]{0}', space=vmem, size = 0x2000, scoped, tag = 'output window, operand 0, single buffered']
    #allocation3 [shape = 's32[1]{0}', space=sflag, size = 0x4, scoped, tag = 'scoped memory for tpu_custom_call.1']
    %11 = vsyncpa [#allocation3], 0
    // Predicated region
    $region2: #{tpu_custom_call.1} parent=1 // pred_check
      _
    $region3: #{tpu_custom_call.1} parent=1 // pred_check_branch
      %13 = sbr.rel (0) target = $region5
    $region4: #{tpu_custom_call.1} parent=1 // pred_region
      _
    $region5: #{tpu_custom_call.1} parent=1 // pred_fallthru
      _
    // Predicated region
    $region6: #{tpu_custom_call.1} parent=1 // pred_check
      _
    $region7: #{tpu_custom_call.1} parent=1 // pred_check_branch
      %15 = sbr.rel (0) target = $region9
    $region8: #{tpu_custom_call.1} parent=1 // pred_region
      _
    $region9: #{tpu_custom_call.1} parent=1 // pred_fallthru
      _
    // Predicated region
    $region10: #{tpu_custom_call.1} parent=1 // pred_check
      _
    $region11: #{tpu_custom_call.1} parent=1 // pred_check_branch
      %17 = sbr.rel (0) target = $region13
    $region12: #{tpu_custom_call.1} parent=1 // pred_region
      _
    $region13: #{tpu_custom_call.1} parent=1 // pred_fallthru
      _
    // Predicated region
    $region14: #{tpu_custom_call.1} parent=1 // pred_check
      _
    $region15: #{tpu_custom_call.1} parent=1 // pred_check_branch
      %19 = sbr.rel (0) target = $region17
    $region16: #{tpu_custom_call.1} parent=1 // pred_region
      _
    $region17: #{tpu_custom_call.1} parent=1 // pred_fallthru
      _
    // Predicated region
    $region18: #{tpu_custom_call.1} parent=1 // pred_check
      _
    $region19: #{tpu_custom_call.1} parent=1 // pred_check_branch
      %21 = sbr.rel (0) target = $region21
    $region20: #{tpu_custom_call.1} parent=1 // pred_region
      _
    $region21: #{tpu_custom_call.1} parent=1 // pred_fallthru
      _
    // Predicated region
    $region22: #{tpu_custom_call.1} parent=1 // pred_check
      _
    $region23: #{tpu_custom_call.1} parent=1 // pred_check_branch
      %23 = sbr.rel (0) target = $region25
    $region24: #{tpu_custom_call.1} parent=1 // pred_region
      _
    $region25: #{tpu_custom_call.1} parent=1 // pred_fallthru
      _
    %v24 = vld [vmem:[%s0] sm:$0xf]
    %v25 = vld [vmem:[%s0 + $0x4] sm:$0xf]
    %v26 = vld [vmem:[%s1] sm:$0xf]
    %v27 = vld [vmem:[%s1 + $0x4] sm:$0xf]
    %v28 = vld [vmem:[%s1 + $0x8] sm:$0xf]
    %v29 = vld [vmem:[%s1 + $0xc] sm:$0xf]
    %v30 = vld [vmem:[%s1 + $0x10] sm:$0xf]
    %v31 = vld [vmem:[%s1 + $0x14] sm:$0xf]
    %v32 = vld [vmem:[%s1 + $0x18] sm:$0xf]
    %v33 = vld [vmem:[%s1 + $0x1c] sm:$0xf]
    %v34 = vld [vmem:[%s1 + $0x20] sm:$0xf]
    %v35 = vld [vmem:[%s1 + $0x24] sm:$0xf]
    %v36 = vld [vmem:[%s1 + $0x28] sm:$0xf]
    %v37 = vld [vmem:[%s1 + $0x2c] sm:$0xf]
    %v38 = vld [vmem:[%s1 + $0x30] sm:$0xf]
    %v39 = vld [vmem:[%s1 + $0x34] sm:$0xf]
    %v40 = vld [vmem:[%s1 + $0x38] sm:$0xf]
    %v41 = vld [vmem:[%s1 + $0x3c] sm:$0xf]
    %v42 = vld [vmem:[%s2] sm:$0x1]
    %v44 = vperm.slane %v42, 0
    %v48 = vunpack.c.l.b16 %v24
    %v49 = vunpack.c.l.b16 %v25
    %v50 = vpack.c.b16 %v49, %v48
    %v68 = vunpack.c.l.b16 %v26
    %v69 = vunpack.c.l.b16 %v27
    %v70 = vunpack.c.l.b16 %v28
    %v71 = vunpack.c.l.b16 %v29
    %v72 = vunpack.c.l.b16 %v30
    %v73 = vunpack.c.l.b16 %v31
    %v74 = vunpack.c.l.b16 %v32
    %v75 = vunpack.c.l.b16 %v33
    %v76 = vunpack.c.l.b16 %v34
    %v77 = vunpack.c.l.b16 %v35
    %v78 = vunpack.c.l.b16 %v36
    %v79 = vunpack.c.l.b16 %v37
    %v80 = vunpack.c.l.b16 %v38
    %v81 = vunpack.c.l.b16 %v39
    %v82 = vunpack.c.l.b16 %v40
    %v83 = vunpack.c.l.b16 %v41
    %v84 = vpack.c.b16 %v69, %v68
    %v85 = vpack.c.b16 %v71, %v70
    %v86 = vpack.c.b16 %v73, %v72
    %v87 = vpack.c.b16 %v75, %v74
    %v88 = vpack.c.b16 %v77, %v76
    %v89 = vpack.c.b16 %v79, %v78
    %v90 = vpack.c.b16 %v81, %v80
    %v91 = vpack.c.b16 %v83, %v82
    %100 = vmatpush.bf16.msra.mxu0 %v91
    %101 = vmatpush.bf16.msra.mxu0 %v90
    %102 = vmatpush.bf16.msra.mxu0 %v89
    %103 = vmatpush.bf16.msra.mxu0 %v88
    %104 = vmatpush.bf16.msra.mxu0 %v87
    %105 = vmatpush.bf16.msra.mxu0 %v86
    %106 = vmatpush.bf16.msra.mxu0 %v85
    %107 = vmatpush.bf16.msra.mxu0 %v84
    %108 = vmatmul.bf16.gmra.mxu0 %v50
    %v109 = vpop.f32.mrf.mxu0
    %v110 = vadd.f32 %v44, %v109
    %v111 = vpop.f32.mrf.mxu0
    %v112 = vadd.f32 %v44, %v111
    %113 = vdwg.mxu0
    %v114 = vld [vmem:[%s3] sm:$0xff]
    %v115 = vld [vmem:[%s3 + $0x8] sm:$0xff]
    %v116 = vadd.f32 %v110, %v114
    %v117 = vadd.f32 %v112, %v115
    %vm118 = vcmask 261120
    %v119 = vsel %vm118, %v116, 0.0
    %120 = vadd.xlane.f32.xlu0 %v119
    %v121 = vpop.xlane.xlu0 %120
    %v122 = vsel %vm118, %v117, 0.0
    %123 = vadd.xlane.f32.xlu0 %v122
    %v124 = vpop.xlane.xlu0 %123
    %v125 = vrcp.pop 32.0
    %v126 = vmul.f32 32.0, %v125
    %v127 = vsub.f32 1.0, %v126
    %v128 = vmul.f32 %v125, %v127
    %v129 = vadd.f32 %v125, %v128
    %vm130 = vweird.f32 %v125
    %v131 = vsel %vm130, %v125, %v129
    %v132 = vmul.f32 %v121, %v131
    %v133 = vmul.f32 %v124, %v131
    %v134 = vsub.f32 %v116, %v132
    %v135 = vsub.f32 %v117, %v133
    %v136 = vmul.f32 %v134, %v134
    %v137 = vmul.f32 %v135, %v135
    %v138 = vsel %vm118, %v136, 0.0
    %139 = vadd.xlane.f32.xlu0 %v138
    %v140 = vpop.xlane.xlu0 %139
    %v141 = vsel %vm118, %v137, 0.0
    %142 = vadd.xlane.f32.xlu0 %v141
    %v143 = vpop.xlane.xlu0 %142
    %v144 = vmul.f32 %v140, %v131
    %v145 = vmul.f32 %v143, %v131
    %v146 = vadd.f32 %v144, 1e-12
    %v147 = vadd.f32 %v145, 1e-12
    %v148 = vrsqrt.pop %v146
    %v149 = vmul.f32 %v148, %v146
    %v150 = vmul.f32 %v149, %v148
    %v151 = vmul.f32 0.5, %v150
    %v152 = vsub.f32 1.5, %v151
    %v153 = vmul.f32 %v148, %v152
    %vm154 = vweird.f32 %v146
    %vm155 = vweird.f32 %v148
    %vm156 = vmor %vm154, %vm155
    %v157 = vsel %vm156, %v148, %v153
    %v158 = vrsqrt.pop %v147
    %v159 = vmul.f32 %v158, %v147
    %v160 = vmul.f32 %v159, %v158
    %v161 = vmul.f32 0.5, %v160
    %v162 = vsub.f32 1.5, %v161
    %v163 = vmul.f32 %v158, %v162
    %vm164 = vweird.f32 %v147
    %vm165 = vweird.f32 %v158
    %vm166 = vmor %vm164, %vm165
    %v167 = vsel %vm166, %v158, %v163
    %v168 = vmul.f32 %v134, %v157
    %v169 = vmul.f32 %v135, %v167
    %v170 = vld [vmem:[%s4] sm:$0x1]
    %v172 = vperm.slane %v170, 0
    %v174 = vmul.f32 %v168, %v172
    %v175 = vmul.f32 %v169, %v172
    %v176 = vld [vmem:[%s5] sm:$0x1]
    %v178 = vperm.slane %v176, 0
    %v180 = vadd.f32 %v174, %v178
    %v181 = vadd.f32 %v175, %v178
    %182 = vst.msk [vmem:[#allocation2] sm:$0xff] %vm118, %v180
    %183 = vst.msk [vmem:[#allocation2 + $0x8] sm:$0xff] %vm118, %v181
    // Predicated region
    $region26: #{tpu_custom_call.1} parent=1 // pred_check
      _
    $region27: #{tpu_custom_call.1} parent=1 // pred_check_branch
      %185 = sbr.rel (0) target = $region29
    $region28: #{tpu_custom_call.1} parent=1 // pred_region
      %187 = vsyncadd [#allocation3], 0
      %s188 = sshll.u32 [#allocation2], 4
      %s189 = int_to_ptr.vmem [resolvable:$true] %s188
      %s190 = sshll.u32 %s6, 4
      %s191 = int_to_ptr.hbm [resolvable:$true] %s190
      %196 = dma.vmem_to_hbm [thread:$0]  %s189, 256, %s191, [#allocation3], 128, 128, 8
    $region29: #{tpu_custom_call.1} parent=1 // pred_fallthru
      _
    // Predicated region
    $region30: #{tpu_custom_call.1} parent=1 // pred_check
      _
    $region31: #{tpu_custom_call.1} parent=1 // pred_check_branch
      %198 = sbr.rel (0) target = $region33
    $region32: #{tpu_custom_call.1} parent=1 // pred_region
      %200 = dma.done [#allocation3], 256
    $region33: #{tpu_custom_call.1} parent=1 // pred_fallthru
      _
    %201 = vsyncpa [#allocation3], 1

</llo_original>
